<compile_context>
chip_gen: v5e
topology: v5e:2x2
jax: 0.10.0
libtpu: 0.0.40
codegen_flags: <defaults>
</compile_context>

<pallas_src>
import functools

import jax
import jax.numpy as jnp
from jax.experimental import pallas as pl
from jax.experimental.pallas import tpu as pltpu

LANE = 128  # vreg lane width; hidden lane dims are zero-padded to this.


def _cdiv(a, b):
    return (a + b - 1) // b


def _round_up(n, m):
    return ((n + m - 1) // m) * m


def mlp_kernel(x_ref, w1_ref, b1_ref, w2_ref, b2_ref, w3_ref, b3_ref, o_ref):
    """Fused 3-layer MLP on one (TILE_B, F) batch tile.

    Matmuls run on the MXU in bf16 with f32 accumulation; cast / bias-add /
    ReLU run on the VPU. Weights and biases are VMEM-resident across all grid
    steps (constant index maps).
    """
    x = x_ref[...].astype(jnp.bfloat16)  # f32 HBM read, free VPU cast in-kernel
    h1 = jnp.dot(x, w1_ref[...], preferred_element_type=jnp.float32) + b1_ref[...]
    h1 = jnp.maximum(h1, 0.0).astype(jnp.bfloat16)
    h2 = jnp.dot(h1, w2_ref[...], preferred_element_type=jnp.float32) + b2_ref[...]
    h2 = jnp.maximum(h2, 0.0).astype(jnp.bfloat16)
    out = jnp.dot(h2, w3_ref[...], preferred_element_type=jnp.float32) + b3_ref[...]
    # Only the real logit columns leave VMEM (32 B/row instead of 512 B/row).
    o_ref[...] = out[:, : o_ref.shape[1]].astype(o_ref.dtype)


def _pad_params(params):
    """Zero-pad lane dims to 128; cast weights to bf16, keep biases in f32.

    Invariant: padded bias entries are exactly 0, so padded hidden lanes stay 0
    through ReLU and the following matmul (required for correctness).
    """
    w1, b1, w2, b2, w3, b3 = params
    f_in = w1.shape[0]
    h1, h2, f_out = w1.shape[1], w2.shape[1], w3.shape[1]
    assert max(h1, h2, f_out) <= LANE, "hidden/output widths must be <= 128"
    w1p = jnp.zeros((f_in, LANE), jnp.float32).at[:, :h1].set(w1)
    w2p = jnp.zeros((LANE, LANE), jnp.float32).at[:h1, :h2].set(w2)
    w3p = jnp.zeros((LANE, LANE), jnp.float32).at[:h2, :f_out].set(w3)
    b1p = jnp.zeros((1, LANE), jnp.float32).at[:, :h1].set(b1.reshape(1, -1))
    b2p = jnp.zeros((1, LANE), jnp.float32).at[:, :h2].set(b2.reshape(1, -1))
    b3p = jnp.zeros((1, LANE), jnp.float32).at[:, :f_out].set(b3.reshape(1, -1))
    return (w1p.astype(jnp.bfloat16), b1p,
            w2p.astype(jnp.bfloat16), b2p,
            w3p.astype(jnp.bfloat16), b3p)


@functools.partial(jax.jit, static_argnames=("tile_b_max",))
def genre_classifier_forward(x, params, tile_b_max=1024):
    """Forward pass on (B, input_features) f32 input -> (B, output_features) f32."""
    w1, b1, w2, b2, w3, b3 = _pad_params(params)
    B, F = x.shape
    h1_dim, h2_dim = params[0].shape[1], params[2].shape[1]
    out_features = params[4].shape[1]  # logical (unpadded) output width

    # Balanced batch tiling: split B over the fewest tiles of size <= tile_b_max,
    # each a multiple of 16 (bf16 sublane packing), so pad waste stays small.
    n_tiles = max(1, _cdiv(B, tile_b_max))
    if B >= 32:
        # Guarantee >= 2 grid steps so the "parallel" axis can shard across both
        # v7x TensorCores (no-op on single-TC v5e/v6e).
        n_tiles = max(n_tiles, 2)
    tile_b = _round_up(_cdiv(B, n_tiles), 16)
    b_pad = _round_up(B, tile_b)

    x_p = x if b_pad == B else jnp.pad(x, ((0, b_pad - B), (0, 0)))

    grid = (b_pad // tile_b,)

    flops = 2 * B * (F * h1_dim + h1_dim * h2_dim + h2_dim * out_features)
    bytes_accessed = (
        B * F * 4 + B * out_features * 4
        + sum(int(p.size) * p.dtype.itemsize for p in (w1, b1, w2, b2, w3, b3)))

    out_padded = pl.pallas_call(
        mlp_kernel,
        out_shape=jax.ShapeDtypeStruct((b_pad, out_features), jnp.float32),
        grid=grid,
        in_specs=[
            pl.BlockSpec((tile_b, F), lambda i: (i, 0)),       # x: marches with grid
            pl.BlockSpec((F, LANE), lambda i: (0, 0)),         # w1: VMEM-resident
            pl.BlockSpec((1, LANE), lambda i: (0, 0)),         # b1
            pl.BlockSpec((LANE, LANE), lambda i: (0, 0)),      # w2
            pl.BlockSpec((1, LANE), lambda i: (0, 0)),         # b2
            pl.BlockSpec((LANE, LANE), lambda i: (0, 0)),      # w3
            pl.BlockSpec((1, LANE), lambda i: (0, 0)),         # b3
        ],
        out_specs=pl.BlockSpec((tile_b, out_features), lambda i: (i, 0)),
        compiler_params=pltpu.CompilerParams(
            dimension_semantics=("parallel",),   # shard batch tiles across TCs (v7x)
        ),
        cost_estimate=pl.CostEstimate(
            flops=flops, transcendentals=0, bytes_accessed=bytes_accessed),
    )(x_p, w1, b1, w2, b2, w3, b3)

    return out_padded if b_pad == B else out_padded[:B]


def init_params(key, input_features, output_features):
    """Deterministic parameter init (logical shapes mirror the PyTorch module)."""
    k1, k2, k3, k4, k5, k6 = jax.random.split(key, 6)
    # fc1: Linear(input_features, 48)
    w1 = jax.random.normal(k1, (input_features, 48), jnp.float32) * 0.1
    b1 = jax.random.normal(k2, (1, 48), jnp.float32) * 0.01
    # fc2: Linear(48, 24)
    w2 = jax.random.normal(k3, (48, 24), jnp.float32) * 0.1
    b2 = jax.random.normal(k4, (1, 24), jnp.float32) * 0.01
    # fc3: Linear(24, output_features)
    w3 = jax.random.normal(k5, (24, output_features), jnp.float32) * 0.1
    b3 = jax.random.normal(k6, (1, output_features), jnp.float32) * 0.01
    return (w1, b1, w2, b2, w3, b3)


def reference_forward(x, params):
    """Pure-JAX f32 reference for correctness checking."""
    w1, b1, w2, b2, w3, b3 = params
    h1 = jnp.maximum(x @ w1 + b1, 0.0)
    h2 = jnp.maximum(h1 @ w2 + b2, 0.0)
    return h2 @ w3 + b3


if __name__ == "__main__":
    INPUT_FEATURES = 32   # e.g. 32 audio features per sample
    OUTPUT_FEATURES = 8   # e.g. 8 genres
    BATCH = 8

    key = jax.random.PRNGKey(0)
    kx, kp = jax.random.split(key)
    x = jax.random.normal(kx, (BATCH, INPUT_FEATURES), jnp.float32)
    params = init_params(kp, INPUT_FEATURES, OUTPUT_FEATURES)

    out = genre_classifier_forward(x, params)
    out = jax.block_until_ready(out)

    ref = reference_forward(x, params)
    assert out.shape == (BATCH, OUTPUT_FEATURES)
    # bf16 MXU inputs with f32 accumulation: compare with a loose tolerance.
    assert jnp.allclose(out, ref, atol=2e-2, rtol=2e-2), "mismatch vs reference"

    print("KERNEL_OK")
</pallas_src>

<mosaic_0001>
module attributes {stable_mosaic.version = 11 : i64} {
  func.func @mlp_kernel(%arg0: i32, %arg1: memref<16x32xf32, #tpu.memory_space<vmem>>, %arg2: memref<32x128xbf16, #tpu.memory_space<vmem>>, %arg3: memref<1x128xf32, #tpu.memory_space<vmem>>, %arg4: memref<128x128xbf16, #tpu.memory_space<vmem>>, %arg5: memref<1x128xf32, #tpu.memory_space<vmem>>, %arg6: memref<128x128xbf16, #tpu.memory_space<vmem>>, %arg7: memref<1x128xf32, #tpu.memory_space<vmem>>, %arg8: memref<16x8xf32, #tpu.memory_space<vmem>>) attributes {dimension_semantics = [#tpu.dimension_semantics<parallel>], iteration_bounds = array<i64: 1>, scalar_prefetch = 0 : i64, scratch_operands = 0 : i64, tpu.core_type = #tpu.core_type<tc>, window_params = [{transform_indices = @transform_0, window_bounds = array<i64: 16, 32>}, {pipeline_mode = #tpu.pipeline_mode<synchronous>, transform_indices = @transform_1, window_bounds = array<i64: 32, 128>}, {pipeline_mode = #tpu.pipeline_mode<synchronous>, transform_indices = @transform_2, window_bounds = array<i64: 1, 128>}, {pipeline_mode = #tpu.pipeline_mode<synchronous>, transform_indices = @transform_3, window_bounds = array<i64: 128, 128>}, {pipeline_mode = #tpu.pipeline_mode<synchronous>, transform_indices = @transform_4, window_bounds = array<i64: 1, 128>}, {pipeline_mode = #tpu.pipeline_mode<synchronous>, transform_indices = @transform_5, window_bounds = array<i64: 128, 128>}, {pipeline_mode = #tpu.pipeline_mode<synchronous>, transform_indices = @transform_6, window_bounds = array<i64: 1, 128>}, {transform_indices = @transform_7, window_bounds = array<i64: 16, 8>}]} {
    %c0 = arith.constant 0 : index
    %c0_0 = arith.constant 0 : index
    %0 = vector.load %arg1[%c0, %c0_0] : memref<16x32xf32, #tpu.memory_space<vmem>>, vector<16x32xf32>
    %1 = arith.truncf %0 : vector<16x32xf32> to vector<16x32xbf16>
    %c0_1 = arith.constant 0 : index
    %c0_2 = arith.constant 0 : index
    %2 = vector.load %arg2[%c0_1, %c0_2] : memref<32x128xbf16, #tpu.memory_space<vmem>>, vector<32x128xbf16>
    %cst = arith.constant dense<0.000000e+00> : vector<16x128xf32>
    %3 = tpu.matmul %1, %2, %cst {dimension_numbers = #tpu.dot_dimension_numbers<[1], [0], [0], [1], [0, 0, 1, 1], [], []>} : vector<16x32xbf16>, vector<32x128xbf16>, vector<16x128xf32> -> vector<16x128xf32>
    %c0_3 = arith.constant 0 : index
    %c0_4 = arith.constant 0 : index
    %4 = vector.load %arg3[%c0_3, %c0_4] : memref<1x128xf32, #tpu.memory_space<vmem>>, vector<1x128xf32>
    %5 = vector.broadcast %4 : vector<1x128xf32> to vector<16x128xf32>
    %6 = arith.addf %3, %5 : vector<16x128xf32>
    %cst_5 = arith.constant 0.000000e+00 : f32
    %7 = vector.broadcast %cst_5 : f32 to vector<16x128xf32>
    %8 = arith.maximumf %6, %7 : vector<16x128xf32>
    %9 = arith.truncf %8 : vector<16x128xf32> to vector<16x128xbf16>
    %c0_6 = arith.constant 0 : index
    %c0_7 = arith.constant 0 : index
    %10 = vector.load %arg4[%c0_6, %c0_7] : memref<128x128xbf16, #tpu.memory_space<vmem>>, vector<128x128xbf16>
    %cst_8 = arith.constant dense<0.000000e+00> : vector<16x128xf32>
    %11 = tpu.matmul %9, %10, %cst_8 {dimension_numbers = #tpu.dot_dimension_numbers<[1], [0], [0], [1], [0, 0, 1, 1], [], []>} : vector<16x128xbf16>, vector<128x128xbf16>, vector<16x128xf32> -> vector<16x128xf32>
    %c0_9 = arith.constant 0 : index
    %c0_10 = arith.constant 0 : index
    %12 = vector.load %arg5[%c0_9, %c0_10] : memref<1x128xf32, #tpu.memory_space<vmem>>, vector<1x128xf32>
    %13 = vector.broadcast %12 : vector<1x128xf32> to vector<16x128xf32>
    %14 = arith.addf %11, %13 : vector<16x128xf32>
    %cst_11 = arith.constant 0.000000e+00 : f32
    %15 = vector.broadcast %cst_11 : f32 to vector<16x128xf32>
    %16 = arith.maximumf %14, %15 : vector<16x128xf32>
    %17 = arith.truncf %16 : vector<16x128xf32> to vector<16x128xbf16>
    %c0_12 = arith.constant 0 : index
    %c0_13 = arith.constant 0 : index
    %18 = vector.load %arg6[%c0_12, %c0_13] : memref<128x128xbf16, #tpu.memory_space<vmem>>, vector<128x128xbf16>
    %cst_14 = arith.constant dense<0.000000e+00> : vector<16x128xf32>
    %19 = tpu.matmul %17, %18, %cst_14 {dimension_numbers = #tpu.dot_dimension_numbers<[1], [0], [0], [1], [0, 0, 1, 1], [], []>} : vector<16x128xbf16>, vector<128x128xbf16>, vector<16x128xf32> -> vector<16x128xf32>
    %c0_15 = arith.constant 0 : index
    %c0_16 = arith.constant 0 : index
    %20 = vector.load %arg7[%c0_15, %c0_16] : memref<1x128xf32, #tpu.memory_space<vmem>>, vector<1x128xf32>
    %21 = vector.broadcast %20 : vector<1x128xf32> to vector<16x128xf32>
    %22 = arith.addf %19, %21 : vector<16x128xf32>
    %23 = vector.extract_strided_slice %22 {offsets = [0, 0], sizes = [16, 8], strides = [1, 1]} : vector<16x128xf32> to vector<16x8xf32>
    %c0_17 = arith.constant 0 : index
    %c0_18 = arith.constant 0 : index
    %24 = vector.load %arg8[%c0_17, %c0_18] : memref<16x8xf32, #tpu.memory_space<vmem>>, vector<16x8xf32>
    tpu.vector_store %arg8[%c0_17, %c0_18], %23 {strides = array<i32>} : memref<16x8xf32, #tpu.memory_space<vmem>>, vector<16x8xf32>,
    return
  }
  func.func @transform_0(%arg0: i32) -> (i32, i32) {
    %c0_i32 = arith.constant 0 : i32
    %c0_i32_0 = arith.constant 0 : i32
    return %arg0, %c0_i32 : i32, i32
  }
  func.func @transform_1(%arg0: i32) -> (i32, i32) {
    %c0_i32 = arith.constant 0 : i32
    %c0_i32_0 = arith.constant 0 : i32
    %c0_i32_1 = arith.constant 0 : i32
    return %c0_i32, %c0_i32_0 : i32, i32
  }
  func.func @transform_2(%arg0: i32) -> (i32, i32) {
    %c0_i32 = arith.constant 0 : i32
    %c0_i32_0 = arith.constant 0 : i32
    %c0_i32_1 = arith.constant 0 : i32
    return %c0_i32, %c0_i32_0 : i32, i32
  }
  func.func @transform_3(%arg0: i32) -> (i32, i32) {
    %c0_i32 = arith.constant 0 : i32
    %c0_i32_0 = arith.constant 0 : i32
    %c0_i32_1 = arith.constant 0 : i32
    return %c0_i32, %c0_i32_0 : i32, i32
  }
  func.func @transform_4(%arg0: i32) -> (i32, i32) {
    %c0_i32 = arith.constant 0 : i32
    %c0_i32_0 = arith.constant 0 : i32
    %c0_i32_1 = arith.constant 0 : i32
    return %c0_i32, %c0_i32_0 : i32, i32
  }
  func.func @transform_5(%arg0: i32) -> (i32, i32) {
    %c0_i32 = arith.constant 0 : i32
    %c0_i32_0 = arith.constant 0 : i32
    %c0_i32_1 = arith.constant 0 : i32
    return %c0_i32, %c0_i32_0 : i32, i32
  }
  func.func @transform_6(%arg0: i32) -> (i32, i32) {
    %c0_i32 = arith.constant 0 : i32
    %c0_i32_0 = arith.constant 0 : i32
    %c0_i32_1 = arith.constant 0 : i32
    return %c0_i32, %c0_i32_0 : i32, i32
  }
  func.func @transform_7(%arg0: i32) -> (i32, i32) {
    %c0_i32 = arith.constant 0 : i32
    %c0_i32_0 = arith.constant 0 : i32
    return %arg0, %c0_i32 : i32, i32
  }
}

</mosaic_0001>

<llo_original>
// kernel: genre_classifier_forward.1
$region0: #{genre_classifier_forward.1}
  #allocation0 [shape = 'u32[]', space=smem, size = 0x4, offset = 0x4, fixed_abs, tag = 'smem constant byte address 0x4 - core index']
  #allocation1 [shape = 'u32[72,128]{1,0:T(1,128)}', space=vmem, size = 0x9000, scoped, tag = 'internal scratch']
  %s0 = inlined_call_operand.vmem [shape: f32[16,32], index: 0, kind: input, shape index: {}]
  %s1 = inlined_call_operand.vmem [shape: bf16[32,128], index: 1, kind: input, shape index: {}]
  %s2 = inlined_call_operand.vmem [shape: f32[1,128], index: 2, kind: input, shape index: {}]
  %s3 = inlined_call_operand.vmem [shape: bf16[128,128], index: 3, kind: input, shape index: {}]
  %s4 = inlined_call_operand.vmem [shape: f32[1,128], index: 4, kind: input, shape index: {}]
  %s5 = inlined_call_operand.vmem [shape: bf16[128,128], index: 5, kind: input, shape index: {}]
  %s6 = inlined_call_operand.vmem [shape: f32[1,128], index: 6, kind: input, shape index: {}]
  %s7 = inlined_call_operand.vmem [shape: f32[16,8], index: 7, kind: output, shape index: {}]
  %s8 = sld [smem:[#allocation0]]
  $region38: #{genre_classifier_forward.1} parent=0
    _
  %s10 = ssub.s32 1, %s8
  %s11 = scalar_select 0, %s10, %s8
  // Predicated region
  $region2: #{genre_classifier_forward.1} parent=0 // pred_check
    _
  $region3: #{genre_classifier_forward.1} parent=0 // pred_check_branch
    %13 = sbr.rel (0) target = $region5
  $region4: #{genre_classifier_forward.1} parent=0 // pred_region
    _
  $region5: #{genre_classifier_forward.1} parent=0 // pred_fallthru
    _
  // Predicated region
  $region6: #{genre_classifier_forward.1} parent=0 // pred_check
    _
  $region7: #{genre_classifier_forward.1} parent=0 // pred_check_branch
    %15 = sbr.rel (0) target = $region9
  $region8: #{genre_classifier_forward.1} parent=0 // pred_region
    _
  $region9: #{genre_classifier_forward.1} parent=0 // pred_fallthru
    _
  // Predicated region
  $region10: #{genre_classifier_forward.1} parent=0 // pred_check
    _
  $region11: #{genre_classifier_forward.1} parent=0 // pred_check_branch
    %17 = sbr.rel (0) target = $region13
  $region12: #{genre_classifier_forward.1} parent=0 // pred_region
    _
  $region13: #{genre_classifier_forward.1} parent=0 // pred_fallthru
    _
  // Predicated region
  $region14: #{genre_classifier_forward.1} parent=0 // pred_check
    _
  $region15: #{genre_classifier_forward.1} parent=0 // pred_check_branch
    %19 = sbr.rel (0) target = $region17
  $region16: #{genre_classifier_forward.1} parent=0 // pred_region
    _
  $region17: #{genre_classifier_forward.1} parent=0 // pred_fallthru
    _
  // Predicated region
  $region18: #{genre_classifier_forward.1} parent=0 // pred_check
    _
  $region19: #{genre_classifier_forward.1} parent=0 // pred_check_branch
    %21 = sbr.rel (0) target = $region21
  $region20: #{genre_classifier_forward.1} parent=0 // pred_region
    _
  $region21: #{genre_classifier_forward.1} parent=0 // pred_fallthru
    _
  // Predicated region
  $region22: #{genre_classifier_forward.1} parent=0 // pred_check
    _
  $region23: #{genre_classifier_forward.1} parent=0 // pred_check_branch
    %23 = sbr.rel (0) target = $region25
  $region24: #{genre_classifier_forward.1} parent=0 // pred_region
    _
  $region25: #{genre_classifier_forward.1} parent=0 // pred_fallthru
    _
  // Predicated region
  $region26: #{genre_classifier_forward.1} parent=0 // pred_check
    _
  $region27: #{genre_classifier_forward.1} parent=0 // pred_check_branch
    %25 = sbr.rel (0) target = $region29
  $region28: #{genre_classifier_forward.1} parent=0 // pred_region
    _
  $region29: #{genre_classifier_forward.1} parent=0 // pred_fallthru
    _
  %v27 = vld [vmem:[%s0] sm:$0xff]
  %v28 = vld [vmem:[%s0 + $0x8] sm:$0xff]
  %v29 = vpack.c.bf16 %v28, %v27
  %v30 = vld [vmem:[%s1] sm:$0xf]
  %v31 = vld [vmem:[%s1 + $0x4] sm:$0xf]
  %v32 = vld [vmem:[%s1 + $0x8] sm:$0xf]
  %v33 = vld [vmem:[%s1 + $0xc] sm:$0xf]
  %v34 = vld [vmem:[%s2] sm:$0x1]
  %v36 = vperm.slane %v34, 0
  %v42 = vunpack.c.l.b16 %v30
  %v43 = vunpack.c.l.b16 %v31
  %v44 = vunpack.c.l.b16 %v32
  %v45 = vunpack.c.l.b16 %v33
  %v46 = vpack.c.b16 %v43, %v42
  %v47 = vpack.c.b16 %v45, %v44
  %vm50 = vcmask 261120
  %v52 = vsel %vm50, %v29, 0
  %54 = vmatpush.bf16.msra.mxu0 0
  %55 = vmatpush.bf16.msra.mxu0 0
  %56 = vmatpush.bf16.msra.mxu0 0
  %57 = vmatpush.bf16.msra.mxu0 0
  %58 = vmatpush.bf16.msra.mxu0 0
  %59 = vmatpush.bf16.msra.mxu0 0
  %60 = vmatpush.bf16.msra.mxu0 %v47
  %61 = vmatpush.bf16.msra.mxu0 %v46
  %62 = vmatmul.bf16.gmra.mxu0 %v52
  %v63 = vpop.f32.mrf.mxu0
  %v64 = vadd.f32 %v36, %v63
  %v65 = vpop.f32.mrf.mxu0
  %v66 = vadd.f32 %v36, %v65
  %67 = vdwg.mxu0
  %v68 = vmax.f32 %v64, 0.0
  %v69 = vmax.f32 %v66, 0.0
  %v70 = vpack.c.bf16 %v69, %v68
  %v71 = vld [vmem:[%s3] sm:$0xf]
  %v72 = vld [vmem:[%s3 + $0x4] sm:$0xf]
  %v73 = vld [vmem:[%s3 + $0x8] sm:$0xf]
  %v74 = vld [vmem:[%s3 + $0xc] sm:$0xf]
  %v75 = vld [vmem:[%s3 + $0x10] sm:$0xf]
  %v76 = vld [vmem:[%s3 + $0x14] sm:$0xf]
  %v77 = vld [vmem:[%s3 + $0x18] sm:$0xf]
  %v78 = vld [vmem:[%s3 + $0x1c] sm:$0xf]
  %v79 = vld [vmem:[%s3 + $0x20] sm:$0xf]
  %v80 = vld [vmem:[%s3 + $0x24] sm:$0xf]
  %v81 = vld [vmem:[%s3 + $0x28] sm:$0xf]
  %v82 = vld [vmem:[%s3 + $0x2c] sm:$0xf]
  %v83 = vld [vmem:[%s3 + $0x30] sm:$0xf]
  %v84 = vld [vmem:[%s3 + $0x34] sm:$0xf]
  %v85 = vld [vmem:[%s3 + $0x38] sm:$0xf]
  %v86 = vld [vmem:[%s3 + $0x3c] sm:$0xf]
  %v87 = vld [vmem:[%s4] sm:$0x1]
  %v89 = vperm.slane %v87, 0
  %v107 = vunpack.c.l.b16 %v71
  %v108 = vunpack.c.l.b16 %v72
  %v109 = vunpack.c.l.b16 %v73
  %v110 = vunpack.c.l.b16 %v74
  %v111 = vunpack.c.l.b16 %v75
  %v112 = vunpack.c.l.b16 %v76
  %v113 = vunpack.c.l.b16 %v77
  %v114 = vunpack.c.l.b16 %v78
  %v115 = vunpack.c.l.b16 %v79
  %v116 = vunpack.c.l.b16 %v80
  %v117 = vunpack.c.l.b16 %v81
  %v118 = vunpack.c.l.b16 %v82
  %v119 = vunpack.c.l.b16 %v83
  %v120 = vunpack.c.l.b16 %v84
  %v121 = vunpack.c.l.b16 %v85
  %v122 = vunpack.c.l.b16 %v86
  %v123 = vpack.c.b16 %v108, %v107
  %v124 = vpack.c.b16 %v110, %v109
  %v125 = vpack.c.b16 %v112, %v111
  %v126 = vpack.c.b16 %v114, %v113
  %v127 = vpack.c.b16 %v116, %v115
  %v128 = vpack.c.b16 %v118, %v117
  %v129 = vpack.c.b16 %v120, %v119
  %v130 = vpack.c.b16 %v122, %v121
  %139 = vmatpush.bf16.msra.mxu0 %v130
  %140 = vmatpush.bf16.msra.mxu0 %v129
  %141 = vmatpush.bf16.msra.mxu0 %v128
  %142 = vmatpush.bf16.msra.mxu0 %v127
  %143 = vmatpush.bf16.msra.mxu0 %v126
  %144 = vmatpush.bf16.msra.mxu0 %v125
  %145 = vmatpush.bf16.msra.mxu0 %v124
  %146 = vmatpush.bf16.msra.mxu0 %v123
  %147 = vmatmul.bf16.gmra.mxu0 %v70
  %v148 = vpop.f32.mrf.mxu0
  %v149 = vadd.f32 %v89, %v148
  %v150 = vpop.f32.mrf.mxu0
  %v151 = vadd.f32 %v89, %v150
  %152 = vdwg.mxu0
  %v153 = vmax.f32 %v149, 0.0
  %v154 = vmax.f32 %v151, 0.0
  %v155 = vpack.c.bf16 %v154, %v153
  %v156 = vld [vmem:[%s5] sm:$0xf]
  %v157 = vld [vmem:[%s5 + $0x4] sm:$0xf]
  %v158 = vld [vmem:[%s5 + $0x8] sm:$0xf]
  %v159 = vld [vmem:[%s5 + $0xc] sm:$0xf]
  %v160 = vld [vmem:[%s5 + $0x10] sm:$0xf]
  %v161 = vld [vmem:[%s5 + $0x14] sm:$0xf]
  %v162 = vld [vmem:[%s5 + $0x18] sm:$0xf]
  %v163 = vld [vmem:[%s5 + $0x1c] sm:$0xf]
  %v164 = vld [vmem:[%s5 + $0x20] sm:$0xf]
  %v165 = vld [vmem:[%s5 + $0x24] sm:$0xf]
  %v166 = vld [vmem:[%s5 + $0x28] sm:$0xf]
  %v167 = vld [vmem:[%s5 + $0x2c] sm:$0xf]
  %v168 = vld [vmem:[%s5 + $0x30] sm:$0xf]
  %v169 = vld [vmem:[%s5 + $0x34] sm:$0xf]
  %v170 = vld [vmem:[%s5 + $0x38] sm:$0xf]
  %v171 = vld [vmem:[%s5 + $0x3c] sm:$0xf]
  %v172 = vld [vmem:[%s6] sm:$0x1]
  %v174 = vperm.slane %v172, 0
  %v192 = vunpack.c.l.b16 %v156
  %v193 = vunpack.c.l.b16 %v157
  %v194 = vunpack.c.l.b16 %v158
  %v195 = vunpack.c.l.b16 %v159
  %v196 = vunpack.c.l.b16 %v160
  %v197 = vunpack.c.l.b16 %v161
  %v198 = vunpack.c.l.b16 %v162
  %v199 = vunpack.c.l.b16 %v163
  %v200 = vunpack.c.l.b16 %v164
  %v201 = vunpack.c.l.b16 %v165
  %v202 = vunpack.c.l.b16 %v166
  %v203 = vunpack.c.l.b16 %v167
  %v204 = vunpack.c.l.b16 %v168
  %v205 = vunpack.c.l.b16 %v169
  %v206 = vunpack.c.l.b16 %v170
  %v207 = vunpack.c.l.b16 %v171
  %v208 = vpack.c.b16 %v193, %v192
  %v209 = vpack.c.b16 %v195, %v194
  %v210 = vpack.c.b16 %v197, %v196
  %v211 = vpack.c.b16 %v199, %v198
  %v212 = vpack.c.b16 %v201, %v200
  %v213 = vpack.c.b16 %v203, %v202
  %v214 = vpack.c.b16 %v205, %v204
  %v215 = vpack.c.b16 %v207, %v206
  %224 = vmatpush.bf16.msra.mxu0 %v215
  %225 = vmatpush.bf16.msra.mxu0 %v214
  %226 = vmatpush.bf16.msra.mxu0 %v213
  %227 = vmatpush.bf16.msra.mxu0 %v212
  %228 = vmatpush.bf16.msra.mxu0 %v211
  %229 = vmatpush.bf16.msra.mxu0 %v210
  %230 = vmatpush.bf16.msra.mxu0 %v209
  %231 = vmatpush.bf16.msra.mxu0 %v208
  %232 = vmatmul.bf16.gmra.mxu0 %v155
  %v233 = vpop.f32.mrf.mxu0
  %v234 = vadd.f32 %v174, %v233
  %v235 = vpop.f32.mrf.mxu0
  %v236 = vadd.f32 %v174, %v235
  %237 = vdwg.mxu0
  %vm238 = vcmask 64512
  %239 = vst.msk [vmem:[%s7] sm:$0xff] %vm238, %v234
  %240 = vst.msk [vmem:[%s7 + $0x8] sm:$0xff] %vm238, %v236
  // Predicated region
  $region30: #{genre_classifier_forward.1} parent=0 // pred_check
    _
  $region31: #{genre_classifier_forward.1} parent=0 // pred_check_branch
    %242 = sbr.rel (0) target = $region33
  $region32: #{genre_classifier_forward.1} parent=0 // pred_region
    _
  $region33: #{genre_classifier_forward.1} parent=0 // pred_fallthru
    _
  // Predicated region
  $region34: #{genre_classifier_forward.1} parent=0 // pred_check
    _
  $region35: #{genre_classifier_forward.1} parent=0 // pred_check_branch
    %244 = sbr.rel (0) target = $region37
  $region36: #{genre_classifier_forward.1} parent=0 // pred_region
    _
  $region37: #{genre_classifier_forward.1} parent=0 // pred_fallthru
    _

</llo_original>
